<compile_context>
chip_gen: v7x
topology: tpu7x:2x2x1
jax: 0.10.0
libtpu: 0.0.40
codegen_flags: <defaults>
</compile_context>

<pallas_src>
import functools
import math

import jax
import jax.numpy as jnp
from jax.experimental import pallas as pl
from jax.experimental.pallas import tpu as pltpu


# ---------------------------------------------------------------------------
# Kernel
# ---------------------------------------------------------------------------
def _linear_act_kernel(x_ref, w_ref, b_ref, o_ref, *, activation, n_k):
    """One (tm, tn) output tile.  Accumulates directly into o_ref (f32) over
    the K grid axis and applies bias + activation on the last K step."""

    def _act(z):
        if activation == "softplus":
            # numerically-stable softplus = max(z, 0) + log1p(exp(-|z|))
            return jnp.maximum(z, 0.0) + jnp.log1p(jnp.exp(-jnp.abs(z)))
        elif activation == "sigmoid":
            return jax.nn.sigmoid(z)
        raise ValueError(f"unsupported activation: {activation}")

    if n_k == 1:
        # Single K block: fuse matmul + bias + activation, no o_ref re-read.
        z = jnp.dot(x_ref[...], w_ref[...],
                    preferred_element_type=jnp.float32) + b_ref[...]
        o_ref[...] = _act(z).astype(o_ref.dtype)
        return

    k = pl.program_id(2)
    part = jnp.dot(x_ref[...], w_ref[...], preferred_element_type=jnp.float32)

    @pl.when(k == 0)
    def _():
        o_ref[...] = part

    @pl.when(k > 0)
    def _():
        o_ref[...] = o_ref[...] + part

    @pl.when(k == n_k - 1)
    def _():
        o_ref[...] = _act(o_ref[...] + b_ref[...]).astype(o_ref.dtype)


# ---------------------------------------------------------------------------
# Tile / VMEM configuration
# ---------------------------------------------------------------------------
def _round_up(x, m):
    return ((x + m - 1) // m) * m


def _ceil_div(a, b):
    return -(-a // b)


def _largest_div_tile(k, max_tk):
    """Largest multiple of 128 <= max_tk that divides k, or None."""
    t = (max_tk // 128) * 128
    while t >= 128:
        if k % t == 0:
            return t
        t -= 128
    return None


def _select_config(B, K, N, in_itemsize, max_tm=None, max_tn=None, max_tk=None):
    # Generation awareness: VMEM capacity and TC count drive the caps.
    vmem_cap = 64 * 1024 * 1024                    # conservative (v7x) fallback
    try:
        vmem_cap = int(pltpu.get_tpu_info().vmem_capacity_bytes)
    except Exception:
        pass
    is_v7x = False
    try:
        is_v7x = "v7" in jax.devices()[0].device_kind.lower()
    except Exception:
        pass

    large_vmem = vmem_cap >= 100 * 1024 * 1024     # v5e / v6e: 128 MiB
    if max_tm is None:
        max_tm = 1024 if large_vmem else 512
    if max_tn is None:
        max_tn = 2048 if large_vmem else 1024
    if max_tk is None:
        max_tk = 2048 if large_vmem else 1024
    budget = int(0.70 * vmem_cap)                  # headroom for Mosaic scratch

    # --- K: full K when it fits; otherwise an exact 128-multiple tile of a
    # (possibly zero-padded) K so padded garbage never enters the accumulation.
    if K <= max_tk:
        tk, Kp = K, K
    else:
        tk = _largest_div_tile(K, max_tk)
        Kp = K
        if tk is None:
            Kp = _round_up(K, 128)
            tk = _largest_div_tile(Kp, max_tk)     # 128 always divides Kp
    n_k = Kp // tk

    # --- M: balanced tiles (avoid a mostly-padded edge block).
    n_i = max(1, _ceil_div(B, max_tm))
    # v7x has 2 TensorCores: a single-block grid would idle one of them.
    if is_v7x and n_i == 1 and B >= 16 and B * Kp * N >= (1 << 20):
        n_i = 2
    tm = _round_up(_ceil_div(B, n_i), 8)

    # --- N: keep W / bias fully resident in VMEM when the byte budget allows.
    def est(tm_, tn_, w_bufs):
        return (2 * tm_ * tk * in_itemsize          # x, double buffered
                + w_bufs * tk * tn_ * in_itemsize   # W
                + w_bufs * tn_ * 4                  # bias (f32)
                + 2 * tm_ * tn_ * 4)                # out (f32), double buffered

    if n_k == 1 and est(tm, N, 1) <= budget:
        tn = N
    elif N <= max_tn:
        tn = N
    else:
        tn = max_tn
    resident = (n_k == 1 and tn == N)              # W/bias block index constant
    w_bufs = 1 if resident else 2

    # Shrink tm if the estimate still exceeds the budget (large-N corner cases).
    while tm > 8 and est(tm, tn, w_bufs) > budget:
        tm = _round_up(_ceil_div(tm, 2), 8)

    est_bytes = est(tm, tn, w_bufs)
    vmem_limit = min(max(int(1.5 * est_bytes), 32 * 1024 * 1024),
                     int(0.80 * vmem_cap))
    return tm, tn, tk, Kp, n_k, resident, vmem_limit


def _make_spec(block_shape, index_map, single_buffer=False):
    """BlockSpec; request single buffering for blocks that are grid-resident."""
    if single_buffer:
        try:
            return pl.BlockSpec(block_shape, index_map,
                                pipeline_mode=pl.Buffered(1))
        except Exception:
            pass
    return pl.BlockSpec(block_shape, index_map)


# ---------------------------------------------------------------------------
# Public wrapper
# ---------------------------------------------------------------------------
def output_module_nb_forward(x, weight_t, bias, *, activation="softplus",
                             compute_dtype=None,
                             max_tm=None, max_tn=None, max_tk=None):
    """Pallas forward pass of OutputModuleNBFeatureDispersion.

    x        : (B, K)  decoder representations
    weight_t : (K, N)  (torch nn.Linear weight of shape (N, K), transposed)
    bias     : (N,)
    compute_dtype : optional dtype (e.g. jnp.bfloat16) for the x / W MXU
                    operands; accumulation is always float32.
    returns  : (B, N) float32 negative-binomial means
    """
    if activation not in ("softplus", "sigmoid"):
        raise ValueError(f"unsupported activation: {activation}")

    B, K = x.shape
    K2, N = weight_t.shape
    assert K == K2 and bias.shape == (N,)

    in_dtype = jnp.dtype(compute_dtype) if compute_dtype is not None \
        else jnp.dtype(x.dtype)
    in_itemsize = in_dtype.itemsize

    tm, tn, tk, Kp, n_k, resident, vmem_limit = _select_config(
        B, K, N, in_itemsize, max_tm=max_tm, max_tn=max_tn, max_tk=max_tk)
    assert Kp % tk == 0, "internal error: K tile must divide (padded) K exactly"

    # Zero-pad K if needed (keeps the accumulation exact on padded edge tiles).
    if Kp > K:
        x = jnp.pad(x, ((0, 0), (0, Kp - K)))
        weight_t = jnp.pad(weight_t, ((0, Kp - K), (0, 0)))
    if x.dtype != in_dtype:
        x = x.astype(in_dtype)
    if weight_t.dtype != in_dtype:
        weight_t = weight_t.astype(in_dtype)
    bias2d = bias.reshape(1, N).astype(jnp.float32)

    grid = (pl.cdiv(B, tm), pl.cdiv(N, tn), n_k)

    kernel = functools.partial(_linear_act_kernel, activation=activation,
                               n_k=n_k)

    cost = pl.CostEstimate(
        flops=2 * B * Kp * N,
        transcendentals=2 * B * N,                # exp + log1p per output elem
        bytes_accessed=in_itemsize * (B * Kp + Kp * N) + 4 * (N + B * N),
    )

    return pl.pallas_call(
        kernel,
        out_shape=jax.ShapeDtypeStruct((B, N), jnp.float32),
        grid_spec=pltpu.PrefetchScalarGridSpec(
            num_scalar_prefetch=0,
            grid=grid,
            in_specs=[
                pl.BlockSpec((tm, tk), lambda i, j, k: (i, k)),        # x tile
                _make_spec((tk, tn), lambda i, j, k: (k, j),
                           single_buffer=resident),                    # W tile
                _make_spec((1, tn), lambda i, j, k: (0, j),
                           single_buffer=resident),                    # bias
            ],
            out_specs=pl.BlockSpec((tm, tn), lambda i, j, k: (i, j)),
        ),
        compiler_params=pltpu.CompilerParams(
            dimension_semantics=("parallel", "parallel", "arbitrary"),
            vmem_limit_bytes=vmem_limit,
        ),
        cost_estimate=cost,
    )(x, weight_t, bias2d)


# ---------------------------------------------------------------------------
# Parameter init (nn.Linear-style) and pure-JAX reference
# ---------------------------------------------------------------------------
def init_output_module_params(key, input_dim, output_dim, r_init=2.0):
    """nn.Linear-style init U(-1/sqrt(in), 1/sqrt(in)) plus the log_r parameter
    (log_r is used by log_prob / loss / sample, not by forward)."""
    kw, kb = jax.random.split(key)
    bound = 1.0 / math.sqrt(input_dim)
    # torch weight shape is (output_dim, input_dim); store transposed (K, N).
    weight_t = jax.random.uniform(kw, (input_dim, output_dim),
                                  dtype=jnp.float32, minval=-bound, maxval=bound)
    bias = jax.random.uniform(kb, (output_dim,), dtype=jnp.float32,
                              minval=-bound, maxval=bound)
    log_r = jnp.full((1, output_dim), math.log(r_init), dtype=jnp.float32)
    return weight_t, bias, log_r


def _reference(x, weight_t, bias, activation="softplus"):
    z = x.astype(jnp.float32) @ weight_t.astype(jnp.float32) + bias
    return jax.nn.softplus(z) if activation == "softplus" else jax.nn.sigmoid(z)


# ---------------------------------------------------------------------------
# Demo / self-check
# ---------------------------------------------------------------------------
if __name__ == "__main__":
    key = jax.random.PRNGKey(0)
    kx, kp, kx2, kp2, kx3, kp3 = jax.random.split(key, 6)

    # 1) module-consistent small case: 8 latent reps of dim 32 -> 128 gene means
    batch, input_dim, output_dim = 8, 32, 128
    x = jax.random.normal(kx, (batch, input_dim), dtype=jnp.float32)
    weight_t, bias, log_r = init_output_module_params(kp, input_dim, output_dim,
                                                      r_init=2.0)
    m = jax.block_until_ready(output_module_nb_forward(x, weight_t, bias))
    ref = _reference(x, weight_t, bias)
    assert m.shape == (batch, output_dim)
    assert bool(jnp.all(jnp.isfinite(m)))
    assert bool(jnp.allclose(m, ref, atol=1e-4, rtol=1e-4))

    # 1b) bf16 MXU path on the same inputs (f32 accumulation, looser tolerance)
    m_bf16 = jax.block_until_ready(
        output_module_nb_forward(x, weight_t, bias,
                                 compute_dtype=jnp.bfloat16))
    assert bool(jnp.all(jnp.isfinite(m_bf16)))
    assert bool(jnp.allclose(m_bf16, ref, atol=5e-2, rtol=5e-2))

    # 2) non-divisible batch -> balanced multi-block batch grid + padded edge
    B2, K2, N2 = 1040, 64, 384
    x2 = jax.random.normal(kx2, (B2, K2), dtype=jnp.float32)
    w2, b2, _ = init_output_module_params(kp2, K2, N2, r_init=2.0)
    m2 = jax.block_until_ready(output_module_nb_forward(x2, w2, b2))
    ref2 = _reference(x2, w2, b2)
    assert m2.shape == (B2, N2)
    assert bool(jnp.all(jnp.isfinite(m2)))
    assert bool(jnp.allclose(m2, ref2, atol=1e-4, rtol=1e-4))

    # 3) exercise the tiled-K accumulation path with a non-128-multiple K:
    #    K=300 with max_tk=256 -> K zero-padded to 384, tk=128, 3 K steps.
    B3, K3, N3 = 16, 300, 256
    x3 = jax.random.normal(kx3, (B3, K3), dtype=jnp.float32)
    w3, b3, _ = init_output_module_params(kp3, K3, N3, r_init=2.0)
    m3 = jax.block_until_ready(output_module_nb_forward(x3, w3, b3, max_tk=256))
    ref3 = _reference(x3, w3, b3)
    assert m3.shape == (B3, N3)
    assert bool(jnp.all(jnp.isfinite(m3)))
    assert bool(jnp.allclose(m3, ref3, atol=1e-4, rtol=1e-4))

    # TODO(synk): log_prob / loss (NB log-pmf with lgamma) and sample() are not
    # part of forward() and are not implemented as Pallas kernels here.
    print("KERNEL_OK")
</pallas_src>

<mosaic_0001>
module attributes {stable_mosaic.version = 11 : i64} {
  func.func @_linear_act_kernel(%arg0: i32, %arg1: i32, %arg2: i32, %arg3: memref<8x32xf32, #tpu.memory_space<vmem>>, %arg4: memref<32x128xf32, #tpu.memory_space<vmem>>, %arg5: memref<1x128xf32, #tpu.memory_space<vmem>>, %arg6: memref<8x128xf32, #tpu.memory_space<vmem>>) attributes {dimension_semantics = [#tpu.dimension_semantics<parallel>, #tpu.dimension_semantics<parallel>, #tpu.dimension_semantics<arbitrary>], iteration_bounds = array<i64: 1, 1, 1>, scalar_prefetch = 0 : i64, scratch_operands = 0 : i64, tpu.core_type = #tpu.core_type<tc>, window_params = [{transform_indices = @transform_0, window_bounds = array<i64: 8, 32>}, {pipeline_mode = #tpu.pipeline_mode<synchronous>, transform_indices = @transform_1, window_bounds = array<i64: 32, 128>}, {pipeline_mode = #tpu.pipeline_mode<synchronous>, transform_indices = @transform_2, window_bounds = array<i64: 1, 128>}, {transform_indices = @transform_3, window_bounds = array<i64: 8, 128>}]} {
    %c0 = arith.constant 0 : index
    %c0_0 = arith.constant 0 : index
    %0 = vector.load %arg3[%c0, %c0_0] : memref<8x32xf32, #tpu.memory_space<vmem>>, vector<8x32xf32>
    %c0_1 = arith.constant 0 : index
    %c0_2 = arith.constant 0 : index
    %1 = vector.load %arg4[%c0_1, %c0_2] : memref<32x128xf32, #tpu.memory_space<vmem>>, vector<32x128xf32>
    %cst = arith.constant dense<0.000000e+00> : vector<8x128xf32>
    %2 = tpu.matmul %0, %1, %cst {dimension_numbers = #tpu.dot_dimension_numbers<[1], [0], [0], [1], [0, 0, 1, 1], [], []>} : vector<8x32xf32>, vector<32x128xf32>, vector<8x128xf32> -> vector<8x128xf32>
    %c0_3 = arith.constant 0 : index
    %c0_4 = arith.constant 0 : index
    %3 = vector.load %arg5[%c0_3, %c0_4] : memref<1x128xf32, #tpu.memory_space<vmem>>, vector<1x128xf32>
    %4 = vector.broadcast %3 : vector<1x128xf32> to vector<8x128xf32>
    %5 = arith.addf %2, %4 : vector<8x128xf32>
    %cst_5 = arith.constant 0.000000e+00 : f32
    %6 = vector.broadcast %cst_5 : f32 to vector<8x128xf32>
    %7 = arith.maximumf %5, %6 : vector<8x128xf32>
    %8 = math.absf %5 : vector<8x128xf32>
    %cst_6 = arith.constant 0.000000e+00 : f32
    %9 = vector.broadcast %cst_6 : f32 to vector<8x128xf32>
    %10 = arith.subf %9, %8 : vector<8x128xf32>
    %11 = math.exp %10 : vector<8x128xf32>
    %12 = math.log1p %11 : vector<8x128xf32>
    %13 = arith.addf %7, %12 : vector<8x128xf32>
    %c0_7 = arith.constant 0 : index
    %c0_8 = arith.constant 0 : index
    %14 = vector.load %arg6[%c0_7, %c0_8] : memref<8x128xf32, #tpu.memory_space<vmem>>, vector<8x128xf32>
    tpu.vector_store %arg6[%c0_7, %c0_8], %13 {strides = array<i32>} : memref<8x128xf32, #tpu.memory_space<vmem>>, vector<8x128xf32>,
    return
  }
  func.func @transform_0(%arg0: i32, %arg1: i32, %arg2: i32) -> (i32, i32) {
    %c0_i32 = arith.constant 0 : i32
    return %arg0, %arg2 : i32, i32
  }
  func.func @transform_1(%arg0: i32, %arg1: i32, %arg2: i32) -> (i32, i32) {
    %c0_i32 = arith.constant 0 : i32
    return %arg2, %arg1 : i32, i32
  }
  func.func @transform_2(%arg0: i32, %arg1: i32, %arg2: i32) -> (i32, i32) {
    %c0_i32 = arith.constant 0 : i32
    %c0_i32_0 = arith.constant 0 : i32
    return %c0_i32, %arg1 : i32, i32
  }
  func.func @transform_3(%arg0: i32, %arg1: i32, %arg2: i32) -> (i32, i32) {
    %c0_i32 = arith.constant 0 : i32
    return %arg0, %arg1 : i32, i32
  }
}

</mosaic_0001>

<llo_original>
// kernel: tpu_custom_call.1
$region0: #{tpu_custom_call.1}
  #allocation0 [shape = 'u32[]', space=smem, size = 0x4, offset = 0x4, fixed_abs, tag = 'smem constant byte address 0x4 - core index']
  #allocation1 [shape = 'u32[144,128]{1,0:T(1,128)}', space=vmem, size = 0x12000, scoped, tag = 'internal scratch']
  %s0 = inlined_call_operand.hbm [shape: f32[8,32], index: 0, kind: input, shape index: {}]
  %s1 = inlined_call_operand.hbm [shape: f32[32,128], index: 1, kind: input, shape index: {}]
  %s2 = inlined_call_operand.vmem [shape: f32[1,128], index: 2, kind: input, shape index: {}]
  %s3 = inlined_call_operand.hbm [shape: f32[8,128], index: 3, kind: output, shape index: {}]
  %s4 = sld [smem:[#allocation0]]
  $region30: #{tpu_custom_call.1} parent=0
    _
  %s6 = ssub.s32 1, %s4
  %s7 = scalar_select 0, %s6, %s4
  $region1: #{tpu_custom_call.1} parent=0
    #allocation2 [shape = 'u8[4096]{0}', space=vmem, size = 0x1000, scoped, tag = 'input window, operand 0, single buffered']
    #allocation3 [shape = 's32[1]{0}', space=sflag, size = 0x4, scoped, tag = 'scoped memory for tpu_custom_call.1']
    #allocation4 [shape = 's32[1]{0}', space=sflag, size = 0x4, scoped, tag = 'scoped memory for tpu_custom_call.1']
    #allocation5 [shape = 'u8[16384]{0}', space=vmem, size = 0x4000, scoped, tag = 'input window, operand 1, single buffered']
    #allocation6 [shape = 's32[1]{0}', space=sflag, size = 0x4, scoped, tag = 'scoped memory for tpu_custom_call.1']
    #allocation7 [shape = 'u8[4096]{0}', space=vmem, size = 0x1000, scoped, tag = 'output window, operand 0, single buffered']
    %8 = vsyncpa [#allocation3], 0
    %9 = vsyncpa [#allocation6], 0
    %10 = vsyncpa [#allocation4], 0
    // Predicated region
    $region2: #{tpu_custom_call.1} parent=1 // pred_check
      _
    $region3: #{tpu_custom_call.1} parent=1 // pred_check_branch
      %12 = sbr.rel (0) target = $region5
    $region4: #{tpu_custom_call.1} parent=1 // pred_region
      %s14 = ssub.s32 128, 128
      %15 = vsyncadd [#allocation3], %s14
      %s17 = sshll.u32 [#allocation2], 4
      %s18 = int_to_ptr.vmem [resolvable:$true] %s17
      %20 = dma.hbm_to_vmem [thread:$0]  %s0, 128, %s18, [#allocation3]
    $region5: #{tpu_custom_call.1} parent=1 // pred_fallthru
      _
    // Predicated region
    $region6: #{tpu_custom_call.1} parent=1 // pred_check
      _
    $region7: #{tpu_custom_call.1} parent=1 // pred_check_branch
      %22 = sbr.rel (0) target = $region9
    $region8: #{tpu_custom_call.1} parent=1 // pred_region
      %s24 = ssub.s32 512, 512
      %25 = vsyncadd [#allocation6], %s24
      %s26 = sshll.u32 [#allocation5], 4
      %s27 = int_to_ptr.vmem [resolvable:$true] %s26
      %32 = dma.hbm_to_vmem [thread:$0]  %s1, 512, %s27, [#allocation6], 128, 128, 8
    $region9: #{tpu_custom_call.1} parent=1 // pred_fallthru
      _
    // Predicated region
    $region10: #{tpu_custom_call.1} parent=1 // pred_check
      _
    $region11: #{tpu_custom_call.1} parent=1 // pred_check_branch
      %34 = sbr.rel (0) target = $region13
    $region12: #{tpu_custom_call.1} parent=1 // pred_region
      _
    $region13: #{tpu_custom_call.1} parent=1 // pred_fallthru
      _
    // Predicated region
    $region14: #{tpu_custom_call.1} parent=1 // pred_check
      _
    $region15: #{tpu_custom_call.1} parent=1 // pred_check_branch
      %36 = sbr.rel (0) target = $region17
    $region16: #{tpu_custom_call.1} parent=1 // pred_region
      %37 = dma.done [#allocation3], 128
    $region17: #{tpu_custom_call.1} parent=1 // pred_fallthru
      _
    // Predicated region
    $region18: #{tpu_custom_call.1} parent=1 // pred_check
      _
    $region19: #{tpu_custom_call.1} parent=1 // pred_check_branch
      %39 = sbr.rel (0) target = $region21
    $region20: #{tpu_custom_call.1} parent=1 // pred_region
      %40 = dma.done [#allocation6], 512
    $region21: #{tpu_custom_call.1} parent=1 // pred_fallthru
      _
    %v41 = vld [vmem:[#allocation2] sm:$0xff]
    %v42 = vld [vmem:[#allocation5] sm:$0xff]
    %v43 = vld [vmem:[#allocation5 + $0x8] sm:$0xff]
    %v44 = vld [vmem:[#allocation5 + $0x10] sm:$0xff]
    %v45 = vld [vmem:[#allocation5 + $0x18] sm:$0xff]
    %v46 = vld [vmem:[%s2] sm:$0x1]
    %v48 = vlaneseq
    %v49 = vshrl.u32 %v48, 7
    %v50 = vsub.s32 0, %v49
    %v51 = vrot.slane %v46, %v50
    %vm53 = vcmask 261120
    %v55 = vsel %vm53, %v41, 0
    %57 = vmatprep.subr.mxu0 0.0
    %58 = vmatpush1.msra.mxu0 %v42
    %59 = vmatprep.subr.mxu0 0.0
    %60 = vmatpush1.msra.mxu0 %v43
    %61 = vmatprep.subr.mxu0 0.0
    %62 = vmatpush1.msra.mxu0 %v44
    %63 = vmatprep.subr.mxu0 0.0
    %64 = vmatpush1.msra.mxu0 %v45
    %65 = vmatprep.subr.mxu0 0.0
    %66 = vmatpush1.msra.mxu0 0.0
    %67 = vmatprep.subr.mxu0 0.0
    %68 = vmatpush1.msra.mxu0 0.0
    %69 = vmatprep.subr.mxu0 0.0
    %70 = vmatpush1.msra.mxu0 0.0
    %71 = vmatprep.subr.mxu0 0.0
    %72 = vmatpush1.msra.mxu0 0.0
    %73 = vmatprep.subr.mxu0 0.0
    %74 = vmatpush1.msra.mxu0 0.0
    %75 = vmatprep.subr.mxu0 0.0
    %76 = vmatpush1.msra.mxu0 0.0
    %77 = vmatprep.subr.mxu0 0.0
    %78 = vmatpush1.msra.mxu0 0.0
    %79 = vmatprep.subr.mxu0 0.0
    %80 = vmatpush1.msra.mxu0 0.0
    %81 = vmatprep.subr.mxu0 0.0
    %82 = vmatpush1.msra.mxu0 0.0
    %83 = vmatprep.subr.mxu0 0.0
    %84 = vmatpush1.msra.mxu0 0.0
    %85 = vmatprep.subr.mxu0 0.0
    %86 = vmatpush1.msra.mxu0 0.0
    %87 = vmatprep.subr.mxu0 0.0
    %88 = vmatpush1.msra.mxu0 0.0
    %89 = vmatprep.subr.mxu0 0.0
    %90 = vmatpush1.msra.mxu0 0.0
    %91 = vmatprep.subr.mxu0 0.0
    %92 = vmatpush1.msra.mxu0 0.0
    %93 = vmatprep.subr.mxu0 0.0
    %94 = vmatpush1.msra.mxu0 0.0
    %95 = vmatprep.subr.mxu0 0.0
    %96 = vmatpush1.msra.mxu0 0.0
    %97 = vmatprep.subr.mxu0 0.0
    %98 = vmatpush1.msra.mxu0 0.0
    %99 = vmatprep.subr.mxu0 0.0
    %100 = vmatpush1.msra.mxu0 0.0
    %101 = vmatprep.subr.mxu0 0.0
    %102 = vmatpush1.msra.mxu0 0.0
    %103 = vmatprep.subr.mxu0 0.0
    %104 = vmatpush1.msra.mxu0 0.0
    %105 = vmatprep.subr.mxu0 0.0
    %106 = vmatpush1.msra.mxu0 0.0
    %107 = vmatprep.subr.mxu0 0.0
    %108 = vmatpush1.msra.mxu0 0.0
    %109 = vmatprep.subr.mxu0 0.0
    %110 = vmatpush1.msra.mxu0 0.0
    %111 = vmatprep.subr.mxu0 0.0
    %112 = vmatpush1.msra.mxu0 0.0
    %113 = vmatprep.subr.mxu0 0.0
    %114 = vmatpush1.msra.mxu0 0.0
    %115 = vmatprep.subr.mxu0 0.0
    %116 = vmatpush1.msra.mxu0 0.0
    %117 = vmatprep.subr.mxu0 0.0
    %118 = vmatpush1.msra.mxu0 0.0
    %119 = vmatprep.subr.mxu0 0.0
    %120 = vmatpush1.msra.mxu0 0.0
    %121 = vmatprep.mubr.f32.mxu0 0.0
    %122 = vmatmul.mubr.f32.gmra.mrb[0].mxu0 %v55
    %v123 = vpop.f32.mrb[0].mxu0
    %v124 = vadd.f32 %v51, %v123
    %v125 = vpop.f32.mrb[0].mxu0
    %126 = vdwg.mxu0
    %v127 = vmax.f32 %v124, 0.0
    %v128 = vand.u32 2147483647, %v124
    %v129 = vsub.f32 0.0, %v128
    %v130 = vmul.f32 %v129, 1.442695
    %v131 = vpow.pop %v130
    %v132 = vadd.f32 %v131, 1.0
    %v133 = vlog2.pop %v132
    %v134 = vmul.f32 %v133, 0.6931472
    %v135 = vmul.f32 -0.5, %v131
    %v136 = vadd.f32 %v135, 1.0
    %v137 = vmul.f32 %v136, %v131
    %v138 = vand.u32 2147483647, %v131
    %vm139 = vcmp.lt.f32.partialorder %v138, 0.0004427343
    %v140 = vsel %vm139, %v137, %v134
    %v141 = vadd.f32 %v127, %v140
    %142 = vst [vmem:[#allocation7] sm:$0xff] %v141
    // Predicated region
    $region22: #{tpu_custom_call.1} parent=1 // pred_check
      _
    $region23: #{tpu_custom_call.1} parent=1 // pred_check_branch
      %144 = sbr.rel (0) target = $region25
    $region24: #{tpu_custom_call.1} parent=1 // pred_region
      %s146 = ssub.s32 128, 128
      %147 = vsyncadd [#allocation4], %s146
      %s149 = sshll.u32 [#allocation7], 4
      %s150 = int_to_ptr.vmem [resolvable:$true] %s149
      %152 = dma.vmem_to_hbm [thread:$0]  %s150, 128, %s3, [#allocation4]
    $region25: #{tpu_custom_call.1} parent=1 // pred_fallthru
      _
    // Predicated region
    $region26: #{tpu_custom_call.1} parent=1 // pred_check
      _
    $region27: #{tpu_custom_call.1} parent=1 // pred_check_branch
      %154 = sbr.rel (0) target = $region29
    $region28: #{tpu_custom_call.1} parent=1 // pred_region
      %155 = dma.done [#allocation4], 128
    $region29: #{tpu_custom_call.1} parent=1 // pred_fallthru
      _
    %156 = vsyncpa [#allocation3], 1
    %157 = vsyncpa [#allocation6], 1
    %158 = vsyncpa [#allocation4], 1

</llo_original>
